<compile_context>
chip_gen: v7x
topology: tpu7x:2x2x1
jax: 0.10.0
libtpu: 0.0.40
codegen_flags: <defaults>
</compile_context>

<pallas_src>
import functools

import jax
import jax.numpy as jnp
from jax.experimental import pallas as pl
from jax.experimental.pallas import tpu as pltpu


def _round_up(x, m):
    return ((x + m - 1) // m) * m


def graph_embedding_kernel(x_ref, w1_ref, b1_ref, w2_ref, b2_ref, o_ref, *,
                           mxu_dtype):
    # x_ref is a lane-dense (tile, lane) block; weights are block-diagonal so
    # no relayout / reshape is needed around the matmuls.
    x = x_ref[...]
    if mxu_dtype is not None:
        x = x.astype(mxu_dtype)          # explicit cast (bf16 MXU operands)
    # fc1 + bias + ReLU.  Accumulate in f32, epilogue in f32.
    h = jnp.dot(x, w1_ref[...], preferred_element_type=jnp.float32)
    h = jnp.maximum(h + b1_ref[...], 0.0)
    if mxu_dtype is not None:
        h = h.astype(mxu_dtype)
    # fc2 + bias.
    out = jnp.dot(h, w2_ref[...], preferred_element_type=jnp.float32)
    out = out + b2_ref[...]
    o_ref[...] = out.astype(o_ref.dtype)


@functools.partial(jax.jit, static_argnames=("tm", "mxu_bf16"))
def graph_embedding_forward(x, w1, b1, w2, b2, *, tm=8192, mxu_bf16=False):
    N, D_in = x.shape
    H = w1.shape[1]
    assert w1.shape == (D_in, H)
    assert w2.shape == (H, D_in)
    dtype = x.dtype

    # --- Lane-dense view: (N, D_in) row-major == (N/rpv, rpv*D_in) with
    #     rpv*D_in == 128 whenever 128 % D_in == 0 (zero-copy reshape). ---
    if D_in < 128 and 128 % D_in == 0 and N % (128 // D_in) == 0:
        rpv = 128 // D_in
    else:
        rpv = 1                      # fallback: narrow lanes (still correct)
    lane = rpv * D_in

    # --- Zero-pad hidden dim so rpv*H_pad is a multiple of 128 and H_pad is a
    #     multiple of 8.  Hidden never touches HBM; padded columns stay 0
    #     through bias+ReLU and hit zero rows of w2 -> result unchanged. ---
    unit = max(128 // rpv, 8)
    H_pad = _round_up(H, unit)
    h_lane = rpv * H_pad
    if H_pad != H:
        w1 = jnp.pad(w1, ((0, 0), (0, H_pad - H)))
        b1 = jnp.pad(b1, (0, H_pad - H))
        w2 = jnp.pad(w2, ((0, H_pad - H), (0, 0)))

    # --- Block-diagonal weights + lane-replicated biases so both matmuls run
    #     directly on the lane-dense layout (no in-kernel relayout). ---
    if rpv > 1:
        eye = jnp.eye(rpv, dtype=w1.dtype)
        w1_bd = jnp.kron(eye, w1)                 # (lane, h_lane)
        w2_bd = jnp.kron(eye, w2)                 # (h_lane, lane)
        b1_bd = jnp.tile(b1, rpv)                 # (h_lane,)
        b2_bd = jnp.tile(b2, rpv)                 # (lane,)
    else:
        w1_bd, w2_bd, b1_bd, b2_bd = w1, w2, b1, b2
    b1_2d = b1_bd.reshape(1, h_lane).astype(jnp.float32)
    b2_2d = b2_bd.reshape(1, lane).astype(jnp.float32)

    if mxu_bf16:
        w1_bd = w1_bd.astype(jnp.bfloat16)
        w2_bd = w2_bd.astype(jnp.bfloat16)
        mxu_dtype = jnp.bfloat16
    else:
        mxu_dtype = None

    rows_ld = N // rpv
    x_ld = x.reshape(rows_ld, lane)

    # --- Row-tile selection (in lane-dense rows). ---
    x_bytes = jnp.dtype(dtype).itemsize
    w_bytes = jnp.dtype(w1_bd.dtype).itemsize
    VMEM_BUDGET = 16 * 1024 * 1024

    def vmem_est(t):
        io = 2 * 2 * t * lane * x_bytes            # x + out, double-buffered
        hid = t * h_lane * 4                       # f32 hidden intermediate
        wts = 2 * 2 * lane * h_lane * w_bytes      # w1_bd + w2_bd, dbl-buffered
        return io + hid + wts

    if rows_ld <= 8:
        # Tiny batch: one block equal to the full (small) array.
        tile_ld = rows_ld if rows_ld < 8 else 8
    else:
        tile_ld = min(max(8, _round_up(tm // rpv, 8)), _round_up(rows_ld, 8))
        # Keep >= 2 grid steps so the v7x megacore shards row tiles across
        # both TensorCores (the axis is marked "parallel").
        tile_ld = min(tile_ld, _round_up(pl.cdiv(rows_ld, 2), 8))
        # Respect the VMEM budget (matters for large D_in / huge tm).
        while tile_ld > 8 and vmem_est(tile_ld) > VMEM_BUDGET:
            tile_ld = max(8, _round_up(tile_ld // 2, 8))

    grid = (pl.cdiv(rows_ld, tile_ld),)

    cost = pl.CostEstimate(
        flops=4 * rows_ld * lane * h_lane,
        transcendentals=0,
        bytes_accessed=2 * rows_ld * lane * x_bytes
        + 2 * lane * h_lane * w_bytes + (h_lane + lane) * 4,
    )

    out_ld = pl.pallas_call(
        functools.partial(graph_embedding_kernel, mxu_dtype=mxu_dtype),
        out_shape=jax.ShapeDtypeStruct((rows_ld, lane), dtype),
        grid_spec=pltpu.PrefetchScalarGridSpec(
            num_scalar_prefetch=0,
            grid=grid,
            in_specs=[
                pl.BlockSpec((tile_ld, lane), lambda i: (i, 0)),   # x (lane-dense)
                pl.BlockSpec((lane, h_lane), lambda i: (0, 0)),    # w1 block-diag
                pl.BlockSpec((1, h_lane), lambda i: (0, 0)),       # b1 replicated
                pl.BlockSpec((h_lane, lane), lambda i: (0, 0)),    # w2 block-diag
                pl.BlockSpec((1, lane), lambda i: (0, 0)),         # b2 replicated
            ],
            out_specs=pl.BlockSpec((tile_ld, lane), lambda i: (i, 0)),
        ),
        compiler_params=pltpu.CompilerParams(
            dimension_semantics=("parallel",),
            vmem_limit_bytes=32 * 1024 * 1024,
        ),
        cost_estimate=cost,
    )(x_ld, w1_bd, b1_2d, w2_bd, b2_2d)

    return out_ld.reshape(N, D_in)


def init_params(key, input_size, hidden_size, n_clusters, dtype=jnp.float32):
    """Deterministic init mimicking PyTorch nn.Linear (uniform +/- 1/sqrt(fan_in)).

    Weights are stored transposed relative to PyTorch: (in_features, out_features).
    fc3 is initialized for completeness (used only by `predict`, not `forward`).
    """
    k1, k2, k3, k4, k5, k6 = jax.random.split(key, 6)

    def u(k, shape, fan_in):
        bound = 1.0 / jnp.sqrt(jnp.array(fan_in, dtype))
        return jax.random.uniform(k, shape, dtype, minval=-bound, maxval=bound)

    w1 = u(k1, (input_size, hidden_size), input_size)
    b1 = u(k2, (hidden_size,), input_size)
    w2 = u(k3, (hidden_size, input_size), hidden_size)
    b2 = u(k4, (input_size,), hidden_size)
    w3 = u(k5, (input_size, n_clusters), input_size)   # fc3 (unused in forward)
    b3 = u(k6, (n_clusters,), input_size)
    return dict(w1=w1, b1=b1, w2=w2, b2=b2, w3=w3, b3=b3)


if __name__ == "__main__":
    input_size, hidden_size, n_clusters = 32, 64, 4

    key = jax.random.PRNGKey(0)
    kx, kp = jax.random.split(key)
    params = init_params(kp, input_size, hidden_size, n_clusters)

    def ref_fwd(x):
        h = jnp.maximum(
            jnp.dot(x, params["w1"], precision="highest") + params["b1"], 0.0)
        return jnp.dot(h, params["w2"], precision="highest") + params["b2"]

    # f32 path: divisible batch, non-divisible-tile batch, tiny-edge batch.
    for batch in (64, 200, 2):
        xb = jax.random.normal(jax.random.fold_in(kx, batch),
                               (batch, input_size), dtype=jnp.float32)
        out = graph_embedding_forward(
            xb, params["w1"], params["b1"], params["w2"], params["b2"])
        jax.block_until_ready(out)
        assert out.shape == (batch, input_size)
        assert jnp.allclose(out, ref_fwd(xb), atol=1e-4, rtol=1e-4)

    # bf16 MXU operand path (v6e/v7x fast path; f32 accumulation + epilogue).
    xb = jax.random.normal(kx, (256, input_size), dtype=jnp.float32)
    out_bf16 = graph_embedding_forward(
        xb, params["w1"], params["b1"], params["w2"], params["b2"],
        mxu_bf16=True)
    jax.block_until_ready(out_bf16)
    assert jnp.allclose(out_bf16, ref_fwd(xb), atol=5e-2, rtol=5e-2)

    print("KERNEL_OK")
</pallas_src>

<mosaic_0001>
module attributes {stable_mosaic.version = 11 : i64} {
  func.func @graph_embedding_kernel(%arg0: i32, %arg1: memref<8x128xf32, #tpu.memory_space<vmem>>, %arg2: memref<128x256xf32, #tpu.memory_space<vmem>>, %arg3: memref<1x256xf32, #tpu.memory_space<vmem>>, %arg4: memref<256x128xf32, #tpu.memory_space<vmem>>, %arg5: memref<1x128xf32, #tpu.memory_space<vmem>>, %arg6: memref<8x128xf32, #tpu.memory_space<vmem>>) attributes {dimension_semantics = [#tpu.dimension_semantics<parallel>], iteration_bounds = array<i64: 2>, scalar_prefetch = 0 : i64, scratch_operands = 0 : i64, tpu.core_type = #tpu.core_type<tc>, window_params = [{transform_indices = @transform_0, window_bounds = array<i64: 8, 128>}, {pipeline_mode = #tpu.pipeline_mode<synchronous>, transform_indices = @transform_1, window_bounds = array<i64: 128, 256>}, {pipeline_mode = #tpu.pipeline_mode<synchronous>, transform_indices = @transform_2, window_bounds = array<i64: 1, 256>}, {pipeline_mode = #tpu.pipeline_mode<synchronous>, transform_indices = @transform_3, window_bounds = array<i64: 256, 128>}, {pipeline_mode = #tpu.pipeline_mode<synchronous>, transform_indices = @transform_4, window_bounds = array<i64: 1, 128>}, {transform_indices = @transform_5, window_bounds = array<i64: 8, 128>}]} {
    %c0 = arith.constant 0 : index
    %c0_0 = arith.constant 0 : index
    %0 = vector.load %arg1[%c0, %c0_0] : memref<8x128xf32, #tpu.memory_space<vmem>>, vector<8x128xf32>
    %c0_1 = arith.constant 0 : index
    %c0_2 = arith.constant 0 : index
    %1 = vector.load %arg2[%c0_1, %c0_2] : memref<128x256xf32, #tpu.memory_space<vmem>>, vector<128x256xf32>
    %cst = arith.constant dense<0.000000e+00> : vector<8x256xf32>
    %2 = tpu.matmul %0, %1, %cst {dimension_numbers = #tpu.dot_dimension_numbers<[1], [0], [0], [1], [0, 0, 1, 1], [], []>} : vector<8x128xf32>, vector<128x256xf32>, vector<8x256xf32> -> vector<8x256xf32>
    %c0_3 = arith.constant 0 : index
    %c0_4 = arith.constant 0 : index
    %3 = vector.load %arg3[%c0_3, %c0_4] : memref<1x256xf32, #tpu.memory_space<vmem>>, vector<1x256xf32>
    %4 = vector.broadcast %3 : vector<1x256xf32> to vector<8x256xf32>
    %5 = arith.addf %2, %4 : vector<8x256xf32>
    %cst_5 = arith.constant 0.000000e+00 : f32
    %6 = vector.broadcast %cst_5 : f32 to vector<8x256xf32>
    %7 = arith.maximumf %5, %6 : vector<8x256xf32>
    %c0_6 = arith.constant 0 : index
    %c0_7 = arith.constant 0 : index
    %8 = vector.load %arg4[%c0_6, %c0_7] : memref<256x128xf32, #tpu.memory_space<vmem>>, vector<256x128xf32>
    %cst_8 = arith.constant dense<0.000000e+00> : vector<8x128xf32>
    %9 = tpu.matmul %7, %8, %cst_8 {dimension_numbers = #tpu.dot_dimension_numbers<[1], [0], [0], [1], [0, 0, 1, 1], [], []>} : vector<8x256xf32>, vector<256x128xf32>, vector<8x128xf32> -> vector<8x128xf32>
    %c0_9 = arith.constant 0 : index
    %c0_10 = arith.constant 0 : index
    %10 = vector.load %arg5[%c0_9, %c0_10] : memref<1x128xf32, #tpu.memory_space<vmem>>, vector<1x128xf32>
    %11 = vector.broadcast %10 : vector<1x128xf32> to vector<8x128xf32>
    %12 = arith.addf %9, %11 : vector<8x128xf32>
    %c0_11 = arith.constant 0 : index
    %c0_12 = arith.constant 0 : index
    %13 = vector.load %arg6[%c0_11, %c0_12] : memref<8x128xf32, #tpu.memory_space<vmem>>, vector<8x128xf32>
    tpu.vector_store %arg6[%c0_11, %c0_12], %12 {strides = array<i32>} : memref<8x128xf32, #tpu.memory_space<vmem>>, vector<8x128xf32>,
    return
  }
  func.func @transform_0(%arg0: i32) -> (i32, i32) {
    %c0_i32 = arith.constant 0 : i32
    %c0_i32_0 = arith.constant 0 : i32
    return %arg0, %c0_i32 : i32, i32
  }
  func.func @transform_1(%arg0: i32) -> (i32, i32) {
    %c0_i32 = arith.constant 0 : i32
    %c0_i32_0 = arith.constant 0 : i32
    %c0_i32_1 = arith.constant 0 : i32
    return %c0_i32, %c0_i32_0 : i32, i32
  }
  func.func @transform_2(%arg0: i32) -> (i32, i32) {
    %c0_i32 = arith.constant 0 : i32
    %c0_i32_0 = arith.constant 0 : i32
    %c0_i32_1 = arith.constant 0 : i32
    return %c0_i32, %c0_i32_0 : i32, i32
  }
  func.func @transform_3(%arg0: i32) -> (i32, i32) {
    %c0_i32 = arith.constant 0 : i32
    %c0_i32_0 = arith.constant 0 : i32
    %c0_i32_1 = arith.constant 0 : i32
    return %c0_i32, %c0_i32_0 : i32, i32
  }
  func.func @transform_4(%arg0: i32) -> (i32, i32) {
    %c0_i32 = arith.constant 0 : i32
    %c0_i32_0 = arith.constant 0 : i32
    %c0_i32_1 = arith.constant 0 : i32
    return %c0_i32, %c0_i32_0 : i32, i32
  }
  func.func @transform_5(%arg0: i32) -> (i32, i32) {
    %c0_i32 = arith.constant 0 : i32
    %c0_i32_0 = arith.constant 0 : i32
    return %arg0, %c0_i32 : i32, i32
  }
}

</mosaic_0001>

<llo_original>
// kernel: tile.13
$region0: #{tile.13}
  #allocation0 [shape = 's32[1]{0}', space=sflag, size = 0x4, scoped, tag = 'scoped memory for tile.13']
  %s0 = inlined_call_operand.vmem [shape: f32[64], index: 0, kind: input, shape index: {}]
  %s1 = inlined_call_operand.vmem [shape: f32[4,64], index: 1, kind: output, shape index: {}]
  // Predicated region
  $region2: #{tile.13} parent=0 // pred_check
    _
  $region3: #{tile.13} parent=0 // pred_check_branch
    %3 = sbr.rel (0) target = $region5
  $region4: #{tile.13} parent=0 // pred_region
    _
  $region5: #{tile.13} parent=0 // pred_fallthru
    _
  %v4 = vld [vmem:[%s0] ss:$0 sm:$0xff]
  %5 = vst [vmem:[%s1] sm:$0xf] %v4

// kernel: tile.18
$region0: #{tile.18}
  %s0 = inlined_call_operand.vmem [shape: f32[4,64], index: 0, kind: input, shape index: {}]
  %s1 = inlined_call_operand.vmem [shape: f32[1,256], index: 1, kind: output, shape index: {}]
  $region1: #{tile.18} parent=0
    #allocation0 [shape = 'u8[8192]{0}', space=vmem, size = 0x2000, scoped, tag = 'scoped mem for output reshape']
    #allocation1 [shape = 'u8[4096]{0}', space=vmem, size = 0x1000, scoped, tag = 'scoped mem for input reshape']
    %s3 = sshllo.u32 0, 4
    %v4 = vld [vmem:[%s0] sm:%s3]
    %5 = vst [vmem:[#allocation1] sm:%s3] %v4
    %s6 = smov 3
    %v7 = vld [vmem:[#allocation1] ss:$2 sm:%s6]
    %vm8 = vcmask 523264
    %9 = vst.msk [vmem:[#allocation0] ss:$8 sm:$0x3] %vm8, %v7
    %s10 = scalar_lea.vmem [#allocation1], 1
    %s11 = smov 3
    %v12 = vld [vmem:[%s10] ss:$2 sm:%s11]
    %13 = vrot.lane.b32.xlu0 %v12, 64
    %v14 = vpop.permute.xlu0 %13
    %vm15 = vcmask 1048064
    %16 = vst.msk [vmem:[#allocation0] ss:$8 sm:$0x3] %vm15, %v14
    %s18 = sshllo.u32 0, 1
    %v20 = vld [vmem:[#allocation0] sm:%s18]
    %s21 = sshllo.u32 0, 1
    %22 = vst [vmem:[%s1] sm:%s21] %v20
    %s23 = scalar_lea.vmem [#allocation0], 8
    %v24 = vld [vmem:[%s23] sm:%s18]
    %s25 = sshllo.u32 0, 1
    %s26 = scalar_lea.vmem %s1, 1
    %27 = vst [vmem:[%s26] sm:%s25] %v24

// kernel: tile.17
$region0: #{tile.17}
  #allocation0 [shape = 's32[1]{0}', space=sflag, size = 0x4, scoped, tag = 'scoped memory for tile.17']
  %s0 = inlined_call_operand.vmem [shape: f32[32], index: 0, kind: input, shape index: {}]
  %s1 = inlined_call_operand.vmem [shape: f32[4,32], index: 1, kind: output, shape index: {}]
  // Predicated region
  $region2: #{tile.17} parent=0 // pred_check
    _
  $region3: #{tile.17} parent=0 // pred_check_branch
    %3 = sbr.rel (0) target = $region5
  $region4: #{tile.17} parent=0 // pred_region
    _
  $region5: #{tile.17} parent=0 // pred_fallthru
    _
  %v4 = vld [vmem:[%s0] ss:$0 sm:$0xff]
  %5 = vst [vmem:[%s1] sm:$0xf] %v4

// kernel: tile.19
$region0: #{tile.19}
  %s0 = inlined_call_operand.vmem [shape: f32[4,32], index: 0, kind: input, shape index: {}]
  %s1 = inlined_call_operand.vmem [shape: f32[1,128], index: 1, kind: output, shape index: {}]
  $region1: #{tile.19} parent=0
    #allocation0 [shape = 'u8[4096]{0}', space=vmem, size = 0x1000, scoped, tag = 'scoped mem for output reshape']
    #allocation1 [shape = 'u8[4096]{0}', space=vmem, size = 0x1000, scoped, tag = 'scoped mem for input reshape']
    %s3 = sshllo.u32 0, 4
    %v4 = vld [vmem:[%s0] sm:%s3]
    %5 = vst [vmem:[#allocation1] sm:%s3] %v4
    %v6 = vld [vmem:[#allocation1] sm:$0x1]
    %vm7 = vcmask 261120
    %8 = vst.msk [vmem:[#allocation0] sm:$0x1] %vm7, %v6
    %s9 = scalar_lea.vmem [#allocation1], 3
    %v10 = vld [vmem:[%s9] sm:$0x1]
    %11 = vrot.lane.b32.xlu0 %v10, 96
    %v12 = vpop.permute.xlu0 %11
    %vm13 = vcmask 1048320
    %14 = vst.msk [vmem:[#allocation0] sm:$0x1] %vm13, %v12
    %s15 = scalar_lea.vmem [#allocation1], 2
    %v16 = vld [vmem:[%s15] sm:$0x1]
    %17 = vrot.lane.b32.xlu0 %v16, 64
    %v18 = vpop.permute.xlu0 %17
    %vm19 = vcmask 785920
    %20 = vst.msk [vmem:[#allocation0] sm:$0x1] %vm19, %v18
    %s21 = scalar_lea.vmem [#allocation1], 1
    %v22 = vld [vmem:[%s21] sm:$0x1]
    %23 = vrot.lane.b32.xlu0 %v22, 32
    %v24 = vpop.permute.xlu0 %23
    %vm25 = vcmask 523520
    %26 = vst.msk [vmem:[#allocation0] sm:$0x1] %vm25, %v24
    %s28 = sshllo.u32 0, 1
    %v30 = vld [vmem:[#allocation0] sm:%s28]
    %s31 = sshllo.u32 0, 1
    %32 = vst [vmem:[%s1] sm:%s31] %v30

// kernel: graph_embedding_forward.1
$region0: #{graph_embedding_forward.1}
  #allocation0 [shape = 'u32[]', space=smem, size = 0x4, offset = 0x4, fixed_abs, tag = 'smem constant byte address 0x4 - core index']
  #allocation1 [shape = 'u32[144,128]{1,0:T(1,128)}', space=vmem, size = 0x12000, scoped, tag = 'internal scratch']
  %s0 = inlined_call_operand.vmem [shape: f32[16,128], index: 0, kind: input, shape index: {}]
  %s1 = inlined_call_operand.vmem [shape: f32[128,256], index: 1, kind: input, shape index: {}]
  %s2 = inlined_call_operand.vmem [shape: f32[1,256], index: 2, kind: input, shape index: {}]
  %s3 = inlined_call_operand.vmem [shape: f32[256,128], index: 3, kind: input, shape index: {}]
  %s4 = inlined_call_operand.vmem [shape: f32[1,128], index: 4, kind: input, shape index: {}]
  %s5 = inlined_call_operand.vmem [shape: f32[16,128], index: 5, kind: output, shape index: {}]
  %s6 = sld [smem:[#allocation0]]
  $region53: #{graph_embedding_forward.1} parent=0
    _
  %s8 = ssub.s32 1, %s6
  %s9 = scalar_select 0, %s8, %s6
  loop: start=0, step=1, limit=4
  $region2: #{graph_embedding_forward.1} parent=0 // loop_pre_header
    _
  $region3: #{graph_embedding_forward.1} parent=0 // loop_header
    %s11 = sphi 0, %s15
    %p12 = scmp.ge.s32.totalorder %s11, 4
    %s21 = sphi 0, %s23
    %s24 = sphi 0, %s21
    %s25 = sphi 0, %s24
    %s41 = sphi 0, %s25
    %s45 = sphi 0, %s45
    %s47 = sphi 0, %s45
    %s48 = sphi 0, %s47
    %s62 = sphi 0, %s48
    %s66 = sphi 0, %s66
    %s68 = sphi 0, %s66
    %s69 = sphi 0, %s68
    %s83 = sphi 0, %s69
    %s87 = sphi 0, %s87
    %s89 = sphi 0, %s87
    %s90 = sphi 0, %s89
    %s104 = sphi 0, %s90
    %s108 = sphi 0, %s108
    %s110 = sphi 0, %s108
    %s111 = sphi 0, %s110
    %s125 = sphi 0, %s111
    %s131 = sphi 0, %s133
    %s134 = sphi 0, %s131
    %s135 = sphi 0, %s134
    %s151 = sphi 0, %s135
  $region4: #{graph_embedding_forward.1} parent=0 // loop_header_branch
    %14 = sbr.rel (%p12) target = $region8
  $region5: #{graph_embedding_forward.1} parent=0 // loop_body
    %s16 = ssub.s32 %s11, 1
    %s17 = ssub.s32 %s11, 2
    %s18 = sadd.s32 %s11, 1
    %s19 = ssub.s32 %s11, %s18
    %p20 = scmp.eq.s32.totalorder %s19, 0
    %s22 = sadd.s32 %s21, 1
    %s23 = scalar_select %p20, %s21, %s22
    %p26 = pneg %p20
    %p27 = scmp.eq.s32.totalorder %s11, 1
    %p28 = por %p26, %p27
    %p29 = scmp.ne.s32.totalorder %s21, %s24
    %p30 = scmp.eq.s32.totalorder %s11, 0
    %p31 = por %p29, %p30
    %p32 = scmp.ne.s32.totalorder %s21, %s24
    %p33 = scmp.eq.s32.totalorder %s16, 1
    %p34 = por %p32, %p33
    %p35 = scmp.ne.s32.totalorder %s24, %s25
    %p36 = scmp.eq.s32.totalorder %s16, 0
    %p37 = por %p35, %p36
    %p38 = scmp.ne.s32.totalorder %s24, %s25
    %p39 = scmp.eq.s32.totalorder %s17, 1
    %p40 = por %p38, %p39
    %p42 = scmp.ne.s32.totalorder %s25, %s41
    %p43 = scmp.eq.s32.totalorder %s17, 0
    %p44 = por %p42, %p43
    %s46 = sadd.s32 %s45, 1
    %p49 = scmp.eq.s32.totalorder %s11, 1
    %p50 = scmp.ne.s32.totalorder %s45, %s47
    %p51 = scmp.eq.s32.totalorder %s11, 0
    %p52 = por %p50, %p51
    %p53 = scmp.ne.s32.totalorder %s45, %s47
    %p54 = scmp.eq.s32.totalorder %s16, 1
    %p55 = por %p53, %p54
    %p56 = scmp.ne.s32.totalorder %s47, %s48
    %p57 = scmp.eq.s32.totalorder %s16, 0
    %p58 = por %p56, %p57
    %p59 = scmp.ne.s32.totalorder %s47, %s48
    %p60 = scmp.eq.s32.totalorder %s17, 1
    %p61 = por %p59, %p60
    %p63 = scmp.ne.s32.totalorder %s48, %s62
    %p64 = scmp.eq.s32.totalorder %s17, 0
    %p65 = por %p63, %p64
    %s67 = sadd.s32 %s66, 1
    %p70 = scmp.eq.s32.totalorder %s11, 1
    %p71 = scmp.ne.s32.totalorder %s66, %s68
    %p72 = scmp.eq.s32.totalorder %s11, 0
    %p73 = por %p71, %p72
    %p74 = scmp.ne.s32.totalorder %s66, %s68
    %p75 = scmp.eq.s32.totalorder %s16, 1
    %p76 = por %p74, %p75
    %p77 = scmp.ne.s32.totalorder %s68, %s69
    %p78 = scmp.eq.s32.totalorder %s16, 0
    %p79 = por %p77, %p78
    %p80 = scmp.ne.s32.totalorder %s68, %s69
    %p81 = scmp.eq.s32.totalorder %s17, 1
    %p82 = por %p80, %p81
    %p84 = scmp.ne.s32.totalorder %s69, %s83
    %p85 = scmp.eq.s32.totalorder %s17, 0
    %p86 = por %p84, %p85
    %s88 = sadd.s32 %s87, 1
    %p91 = scmp.eq.s32.totalorder %s11, 1
    %p92 = scmp.ne.s32.totalorder %s87, %s89
    %p93 = scmp.eq.s32.totalorder %s11, 0
    %p94 = por %p92, %p93
    %p95 = scmp.ne.s32.totalorder %s87, %s89
    %p96 = scmp.eq.s32.totalorder %s16, 1
    %p97 = por %p95, %p96
    %p98 = scmp.ne.s32.totalorder %s89, %s90
    %p99 = scmp.eq.s32.totalorder %s16, 0
    %p100 = por %p98, %p99
    %p101 = scmp.ne.s32.totalorder %s89, %s90
    %p102 = scmp.eq.s32.totalorder %s17, 1
    %p103 = por %p101, %p102
    %p105 = scmp.ne.s32.totalorder %s90, %s104
    %p106 = scmp.eq.s32.totalorder %s17, 0
    %p107 = por %p105, %p106
    %s109 = sadd.s32 %s108, 1
    %p112 = scmp.eq.s32.totalorder %s11, 1
    %p113 = scmp.ne.s32.totalorder %s108, %s110
    %p114 = scmp.eq.s32.totalorder %s11, 0
    %p115 = por %p113, %p114
    %p116 = scmp.ne.s32.totalorder %s108, %s110
    %p117 = scmp.eq.s32.totalorder %s16, 1
    %p118 = por %p116, %p117
    %p119 = scmp.ne.s32.totalorder %s110, %s111
    %p120 = scmp.eq.s32.totalorder %s16, 0
    %p121 = por %p119, %p120
    %p122 = scmp.ne.s32.totalorder %s110, %s111
    %p123 = scmp.eq.s32.totalorder %s17, 1
    %p124 = por %p122, %p123
    %p126 = scmp.ne.s32.totalorder %s111, %s125
    %p127 = scmp.eq.s32.totalorder %s17, 0
    %p128 = por %p126, %p127
    %s129 = ssub.s32 %s11, %s18
    %p130 = scmp.eq.s32.totalorder %s129, 0
    %s132 = sadd.s32 %s131, 1
    %s133 = scalar_select %p130, %s131, %s132
    %p136 = pneg %p130
    %p137 = scmp.eq.s32.totalorder %s11, 1
    %p138 = por %p136, %p137
    %p139 = scmp.ne.s32.totalorder %s131, %s134
    %p140 = scmp.eq.s32.totalorder %s11, 0
    %p141 = por %p139, %p140
    %p142 = scmp.ne.s32.totalorder %s131, %s134
    %p143 = scmp.eq.s32.totalorder %s16, 1
    %p144 = por %p142, %p143
    %p145 = scmp.ne.s32.totalorder %s134, %s135
    %p146 = scmp.eq.s32.totalorder %s16, 0
    %p147 = por %p145, %p146
    %p148 = scmp.ne.s32.totalorder %s134, %s135
    %p149 = scmp.eq.s32.totalorder %s17, 1
    %p150 = por %p148, %p149
    %p152 = scmp.ne.s32.totalorder %s135, %s151
    %p153 = scmp.eq.s32.totalorder %s17, 0
    %p154 = por %p152, %p153
    %p155 = scmp.le.s32.totalorder 1, %s11
    %p156 = scmp.lt.s32.totalorder %s11, 3
    %p157 = pnand %p155, %p156
    %p158 = pneg %p157
    // Predicated region
    $region9: #{graph_embedding_forward.1} parent=5 // pred_check
      _
    $region10: #{graph_embedding_forward.1} parent=5 // pred_check_branch
      %160 = sbr.rel (%p157) target = $region12
    $region11: #{graph_embedding_forward.1} parent=5 // pred_region
      %s161 = ssub.s32 %s11, 1
      // Predicated region
      $region13: #{graph_embedding_forward.1} parent=11 // pred_check
        %p162 = pneg %p58
      $region14: #{graph_embedding_forward.1} parent=11 // pred_check_branch
        %164 = sbr.rel (%p162) target = $region16
      $region15: #{graph_embedding_forward.1} parent=11 // pred_region
        _
      $region16: #{graph_embedding_forward.1} parent=11 // pred_fallthru
        _
      // Predicated region
      $region17: #{graph_embedding_forward.1} parent=11 // pred_check
        %p165 = pneg %p79
      $region18: #{graph_embedding_forward.1} parent=11 // pred_check_branch
        %167 = sbr.rel (%p165) target = $region20
      $region19: #{graph_embedding_forward.1} parent=11 // pred_region
        _
      $region20: #{graph_embedding_forward.1} parent=11 // pred_fallthru
        _
      // Predicated region
      $region21: #{graph_embedding_forward.1} parent=11 // pred_check
        %p168 = pneg %p100
      $region22: #{graph_embedding_forward.1} parent=11 // pred_check_branch
        %170 = sbr.rel (%p168) target = $region24
      $region23: #{graph_embedding_forward.1} parent=11 // pred_region
        _
      $region24: #{graph_embedding_forward.1} parent=11 // pred_fallthru
        _
      // Predicated region
      $region25: #{graph_embedding_forward.1} parent=11 // pred_check
        %p171 = pneg %p121
      $region26: #{graph_embedding_forward.1} parent=11 // pred_check_branch
        %173 = sbr.rel (%p171) target = $region28
      $region27: #{graph_embedding_forward.1} parent=11 // pred_region
        _
      $region28: #{graph_embedding_forward.1} parent=11 // pred_fallthru
        _
    $region12: #{graph_embedding_forward.1} parent=5 // pred_fallthru
      _
    %p174 = scmp.lt.s32.totalorder %s11, 2
    // Predicated region
    $region29: #{graph_embedding_forward.1} parent=5 // pred_check
      %p175 = pneg %p174
    $region30: #{graph_embedding_forward.1} parent=5 // pred_check_branch
      %177 = sbr.rel (%p175) target = $region32
    $region31: #{graph_embedding_forward.1} parent=5 // pred_region
      // Predicated region
      $region33: #{graph_embedding_forward.1} parent=31 // pred_check
        %p178 = pneg %p31
      $region34: #{graph_embedding_forward.1} parent=31 // pred_check_branch
        %180 = sbr.rel (%p178) target = $region36
      $region35: #{graph_embedding_forward.1} parent=31 // pred_region
        %p181 = scmp.lt.s32.totalorder %s11, 1
        %s182 = scalar_select %p181, %s11, 1
        %s183 = smul.addr %s182, 8
        %s184 = scalar_lea.vmem %s0, %s183
      $region36: #{graph_embedding_forward.1} parent=31 // pred_fallthru
        _
    $region32: #{graph_embedding_forward.1} parent=5 // pred_fallthru
      _
    %p185 = scmp.le.s32.totalorder 1, %s11
    %p186 = scmp.lt.s32.totalorder %s11, 3
    %p187 = pnand %p185, %p186
    %p188 = pneg %p187
    // Predicated region
    $region37: #{graph_embedding_forward.1} parent=5 // pred_check
      _
    $region38: #{graph_embedding_forward.1} parent=5 // pred_check_branch
      %190 = sbr.rel (%p187) target = $region40
    $region39: #{graph_embedding_forward.1} parent=5 // pred_region
      %s191 = ssub.s32 %s11, 1
      %p192 = scmp.lt.s32.totalorder %s16, 1
      %s193 = scalar_select %p192, %s16, 1
      %s194 = smul.addr %s193, 8
      %s195 = scalar_lea.vmem %s0, %s194
      %p196 = pneg %p37
      %p197 = pneg %p34
      %p198 = pneg %p58
      %p199 = pneg %p55
      %p200 = pneg %p79
      %p201 = pneg %p76
      %p202 = pneg %p100
      %p203 = pneg %p97
      %p204 = pneg %p121
      %p205 = pneg %p118
      %p206 = pneg %p147
      %p207 = pneg %p144
      %p208 = scmp.lt.s32.totalorder %s16, 1
      %s209 = scalar_select %p208, %s16, 1
      %s210 = smul.addr %s209, 8
      %s211 = scalar_lea.vmem %s5, %s210
      %p212 = scmp.lt.s32.totalorder %s16, 1
      %s213 = scalar_select %p212, %s16, 1
      %s214 = smul.addr %s213, 8
      %s215 = scalar_lea.vmem %s0, %s214
      %p216 = scmp.lt.s32.totalorder %s16, 1
      %s217 = scalar_select %p216, %s16, 1
      %s218 = smul.addr %s217, 8
      %s219 = scalar_lea.vmem %s5, %s218
      %v220 = vld [vmem:[%s215] sm:$0xff]
      %v221 = vld [vmem:[%s1] sm:$0xff]
      %v222 = vld [vmem:[%s1 + $0x8] sm:$0xff]
      %v223 = vld [vmem:[%s1 + $0x10] sm:$0xff]
      %v224 = vld [vmem:[%s1 + $0x18] sm:$0xff]
      %v225 = vld [vmem:[%s1 + $0x20] sm:$0xff]
      %v226 = vld [vmem:[%s1 + $0x28] sm:$0xff]
      %v227 = vld [vmem:[%s1 + $0x30] sm:$0xff]
      %v228 = vld [vmem:[%s1 + $0x38] sm:$0xff]
      %v229 = vld [vmem:[%s1 + $0x40] sm:$0xff]
      %v230 = vld [vmem:[%s1 + $0x48] sm:$0xff]
      %v231 = vld [vmem:[%s1 + $0x50] sm:$0xff]
      %v232 = vld [vmem:[%s1 + $0x58] sm:$0xff]
      %v233 = vld [vmem:[%s1 + $0x60] sm:$0xff]
      %v234 = vld [vmem:[%s1 + $0x68] sm:$0xff]
      %v235 = vld [vmem:[%s1 + $0x70] sm:$0xff]
      %v236 = vld [vmem:[%s1 + $0x78] sm:$0xff]
      %v237 = vld [vmem:[%s1 + $0x80] sm:$0xff]
      %v238 = vld [vmem:[%s1 + $0x88] sm:$0xff]
      %v239 = vld [vmem:[%s1 + $0x90] sm:$0xff]
      %v240 = vld [vmem:[%s1 + $0x98] sm:$0xff]
      %v241 = vld [vmem:[%s1 + $0xa0] sm:$0xff]
      %v242 = vld [vmem:[%s1 + $0xa8] sm:$0xff]
      %v243 = vld [vmem:[%s1 + $0xb0] sm:$0xff]
      %v244 = vld [vmem:[%s1 + $0xb8] sm:$0xff]
      %v245 = vld [vmem:[%s1 + $0xc0] sm:$0xff]
      %v246 = vld [vmem:[%s1 + $0xc8] sm:$0xff]
      %v247 = vld [vmem:[%s1 + $0xd0] sm:$0xff]
      %v248 = vld [vmem:[%s1 + $0xd8] sm:$0xff]
      %v249 = vld [vmem:[%s1 + $0xe0] sm:$0xff]
      %v250 = vld [vmem:[%s1 + $0xe8] sm:$0xff]
      %v251 = vld [vmem:[%s1 + $0xf0] sm:$0xff]
      %v252 = vld [vmem:[%s1 + $0xf8] sm:$0xff]
      %v253 = vld [vmem:[%s2] sm:$0x3]
      %v255 = vlaneseq
      %v256 = vshrl.u32 %v255, 7
      %v257 = vsub.s32 0, %v256
      %v258 = vrot.slane %v253, %v257
      %v259 = vlaneseq
      %v260 = vshrl.u32 %v259, 7
      %v261 = vsub.s32 1, %v260
      %v262 = vrot.slane %v253, %v261
      %265 = vmatprep.subr.mxu0 %v222
      %266 = vmatpush1.msra.mxu0 %v221
      %267 = vmatprep.subr.mxu0 %v224
      %268 = vmatpush1.msra.mxu0 %v223
      %269 = vmatprep.subr.mxu0 %v226
      %270 = vmatpush1.msra.mxu0 %v225
      %271 = vmatprep.subr.mxu0 %v228
      %272 = vmatpush1.msra.mxu0 %v227
      %273 = vmatprep.subr.mxu0 %v230
      %274 = vmatpush1.msra.mxu0 %v229
      %275 = vmatprep.subr.mxu0 %v232
      %276 = vmatpush1.msra.mxu0 %v231
      %277 = vmatprep.subr.mxu0 %v234
      %278 = vmatpush1.msra.mxu0 %v233
      %279 = vmatprep.subr.mxu0 %v236
      %280 = vmatpush1.msra.mxu0 %v235
      %281 = vmatprep.subr.mxu0 %v238
      %282 = vmatpush1.msra.mxu0 %v237
      %283 = vmatprep.subr.mxu0 %v240
      %284 = vmatpush1.msra.mxu0 %v239
      %285 = vmatprep.subr.mxu0 %v242
      %286 = vmatpush1.msra.mxu0 %v241
      %287 = vmatprep.subr.mxu0 %v244
      %288 = vmatpush1.msra.mxu0 %v243
      %289 = vmatprep.subr.mxu0 %v246
      %290 = vmatpush1.msra.mxu0 %v245
      %291 = vmatprep.subr.mxu0 %v248
      %292 = vmatpush1.msra.mxu0 %v247
      %293 = vmatprep.subr.mxu0 %v250
      %294 = vmatpush1.msra.mxu0 %v249
      %295 = vmatprep.subr.mxu0 %v252
      %296 = vmatpush1.msra.mxu0 %v251
      %297 = vmatprep.subr.mxu0 0.0
      %298 = vmatpush1.msra.mxu0 0.0
      %299 = vmatprep.subr.mxu0 0.0
      %300 = vmatpush1.msra.mxu0 0.0
      %301 = vmatprep.subr.mxu0 0.0
      %302 = vmatpush1.msra.mxu0 0.0
      %303 = vmatprep.subr.mxu0 0.0
      %304 = vmatpush1.msra.mxu0 0.0
      %305 = vmatprep.subr.mxu0 0.0
      %306 = vmatpush1.msra.mxu0 0.0
      %307 = vmatprep.subr.mxu0 0.0
      %308 = vmatpush1.msra.mxu0 0.0
      %309 = vmatprep.subr.mxu0 0.0
      %310 = vmatpush1.msra.mxu0 0.0
      %311 = vmatprep.subr.mxu0 0.0
      %312 = vmatpush1.msra.mxu0 0.0
      %313 = vmatprep.subr.mxu0 0.0
      %314 = vmatpush1.msra.mxu0 0.0
      %315 = vmatprep.subr.mxu0 0.0
      %316 = vmatpush1.msra.mxu0 0.0
      %317 = vmatprep.subr.mxu0 0.0
      %318 = vmatpush1.msra.mxu0 0.0
      %319 = vmatprep.subr.mxu0 0.0
      %320 = vmatpush1.msra.mxu0 0.0
      %321 = vmatprep.subr.mxu0 0.0
      %322 = vmatpush1.msra.mxu0 0.0
      %323 = vmatprep.subr.mxu0 0.0
      %324 = vmatpush1.msra.mxu0 0.0
      %325 = vmatprep.subr.mxu0 0.0
      %326 = vmatpush1.msra.mxu0 0.0
      %327 = vmatprep.subr.mxu0 0.0
      %328 = vmatpush1.msra.mxu0 0.0
      %329 = vmatprep.mubr.f32.mxu0 0.0
      %330 = vmatmul.mubr.f32.gmra.mrb[0].mxu0 %v220
      %v331 = vpop.f32.mrb[0].mxu0
      %v332 = vadd.f32 %v258, %v331
      %v333 = vpop.f32.mrb[0].mxu0
      %v334 = vadd.f32 %v262, %v333
      %335 = vdwg.mxu0
      %v336 = vmax.f32 %v332, 0.0
      %v337 = vmax.f32 %v334, 0.0
      %v338 = vld [vmem:[%s3] sm:$0xff]
      %v339 = vld [vmem:[%s3 + $0x8] sm:$0xff]
      %v340 = vld [vmem:[%s3 + $0x10] sm:$0xff]
      %v341 = vld [vmem:[%s3 + $0x18] sm:$0xff]
      %v342 = vld [vmem:[%s3 + $0x20] sm:$0xff]
      %v343 = vld [vmem:[%s3 + $0x28] sm:$0xff]
      %v344 = vld [vmem:[%s3 + $0x30] sm:$0xff]
      %v345 = vld [vmem:[%s3 + $0x38] sm:$0xff]
      %v346 = vld [vmem:[%s3 + $0x40] sm:$0xff]
      %v347 = vld [vmem:[%s3 + $0x48] sm:$0xff]
      %v348 = vld [vmem:[%s3 + $0x50] sm:$0xff]
      %v349 = vld [vmem:[%s3 + $0x58] sm:$0xff]
      %v350 = vld [vmem:[%s3 + $0x60] sm:$0xff]
      %v351 = vld [vmem:[%s3 + $0x68] sm:$0xff]
      %v352 = vld [vmem:[%s3 + $0x70] sm:$0xff]
      %v353 = vld [vmem:[%s3 + $0x78] sm:$0xff]
      %v354 = vld [vmem:[%s3 + $0x80] sm:$0xff]
      %v355 = vld [vmem:[%s3 + $0x88] sm:$0xff]
      %v356 = vld [vmem:[%s3 + $0x90] sm:$0xff]
      %v357 = vld [vmem:[%s3 + $0x98] sm:$0xff]
      %v358 = vld [vmem:[%s3 + $0xa0] sm:$0xff]
      %v359 = vld [vmem:[%s3 + $0xa8] sm:$0xff]
      %v360 = vld [vmem:[%s3 + $0xb0] sm:$0xff]
      %v361 = vld [vmem:[%s3 + $0xb8] sm:$0xff]
      %v362 = vld [vmem:[%s3 + $0xc0] sm:$0xff]
      %v363 = vld [vmem:[%s3 + $0xc8] sm:$0xff]
      %v364 = vld [vmem:[%s3 + $0xd0] sm:$0xff]
      %v365 = vld [vmem:[%s3 + $0xd8] sm:$0xff]
      %v366 = vld [vmem:[%s3 + $0xe0] sm:$0xff]
      %v367 = vld [vmem:[%s3 + $0xe8] sm:$0xff]
      %v368 = vld [vmem:[%s3 + $0xf0] sm:$0xff]
      %v369 = vld [vmem:[%s3 + $0xf8] sm:$0xff]
      %v370 = vld [vmem:[%s4] sm:$0x1]
      %v372 = vlaneseq
      %v373 = vshrl.u32 %v372, 7
      %v374 = vsub.s32 0, %v373
      %v375 = vrot.slane %v370, %v374
      %377 = vmatprep.subr.mxu0 0.0
      %378 = vmatpush1.msra.mxu0 %v338
      %379 = vmatprep.subr.mxu0 0.0
      %380 = vmatpush1.msra.mxu0 %v339
      %381 = vmatprep.subr.mxu0 0.0
      %382 = vmatpush1.msra.mxu0 %v340
      %383 = vmatprep.subr.mxu0 0.0
      %384 = vmatpush1.msra.mxu0 %v341
      %385 = vmatprep.subr.mxu0 0.0
      %386 = vmatpush1.msra.mxu0 %v342
      %387 = vmatprep.subr.mxu0 0.0
      %388 = vmatpush1.msra.mxu0 %v343
      %389 = vmatprep.subr.mxu0 0.0
      %390 = vmatpush1.msra.mxu0 %v344
      %391 = vmatprep.subr.mxu0 0.0
      %392 = vmatpush1.msra.mxu0 %v345
      %393 = vmatprep.subr.mxu0 0.0
      %394 = vmatpush1.msra.mxu0 %v346
      %395 = vmatprep.subr.mxu0 0.0
      %396 = vmatpush1.msra.mxu0 %v347
      %397 = vmatprep.subr.mxu0 0.0
      %398 = vmatpush1.msra.mxu0 %v348
      %399 = vmatprep.subr.mxu0 0.0
      %400 = vmatpush1.msra.mxu0 %v349
      %401 = vmatprep.subr.mxu0 0.0
      %402 = vmatpush1.msra.mxu0 %v350
      %403 = vmatprep.subr.mxu0 0.0
      %404 = vmatpush1.msra.mxu0 %v351
      %405 = vmatprep.subr.mxu0 0.0
      %406 = vmatpush1.msra.mxu0 %v352
      %407 = vmatprep.subr.mxu0 0.0
      %408 = vmatpush1.msra.mxu0 %v353
      %409 = vmatprep.subr.mxu0 0.0
      %410 = vmatpush1.msra.mxu0 %v354
      %411 = vmatprep.subr.mxu0 0.0
      %412 = vmatpush1.msra.mxu0 %v355
      %413 = vmatprep.subr.mxu0 0.0
      %414 = vmatpush1.msra.mxu0 %v356
      %415 = vmatprep.subr.mxu0 0.0
      %416 = vmatpush1.msra.mxu0 %v357
      %417 = vmatprep.subr.mxu0 0.0
      %418 = vmatpush1.msra.mxu0 %v358
      %419 = vmatprep.subr.mxu0 0.0
      %420 = vmatpush1.msra.mxu0 %v359
      %421 = vmatprep.subr.mxu0 0.0
      %422 = vmatpush1.msra.mxu0 %v360
      %423 = vmatprep.subr.mxu0 0.0
      %424 = vmatpush1.msra.mxu0 %v361
      %425 = vmatprep.subr.mxu0 0.0
      %426 = vmatpush1.msra.mxu0 %v362
      %427 = vmatprep.subr.mxu0 0.0
      %428 = vmatpush1.msra.mxu0 %v363
      %429 = vmatprep.subr.mxu0 0.0
      %430 = vmatpush1.msra.mxu0 %v364
      %431 = vmatprep.subr.mxu0 0.0
      %432 = vmatpush1.msra.mxu0 %v365
      %433 = vmatprep.subr.mxu0 0.0
      %434 = vmatpush1.msra.mxu0 %v366
      %435 = vmatprep.subr.mxu0 0.0
      %436 = vmatpush1.msra.mxu0 %v367
      %437 = vmatprep.subr.mxu0 0.0
      %438 = vmatpush1.msra.mxu0 %v368
      %439 = vmatprep.subr.mxu0 0.0
      %440 = vmatpush1.msra.mxu0 %v369
      %441 = vmatprep.mubr.f32.mxu0 %v337
      %442 = vmatmul.mubr.f32.gmra.mrb[0].mxu0 %v336
      %v443 = vpop.f32.mrb[0].mxu0
      %v444 = vadd.f32 %v375, %v443
      %v445 = vpop.f32.mrb[0].mxu0
      %446 = vdwg.mxu0
      %447 = vst [vmem:[%s219] sm:$0xff] %v444
      %p448 = scmp.lt.s32.totalorder %s16, 1
      %s449 = scalar_select %p448, %s16, 1
      %s450 = smul.addr %s449, 8
      %s451 = scalar_lea.vmem %s5, %s450
      // Predicated region
      $region41: #{graph_embedding_forward.1} parent=39 // pred_check
        %p452 = pneg %p144
      $region42: #{graph_embedding_forward.1} parent=39 // pred_check_branch
        %454 = sbr.rel (%p452) target = $region44
      $region43: #{graph_embedding_forward.1} parent=39 // pred_region
        _
      $region44: #{graph_embedding_forward.1} parent=39 // pred_fallthru
        _
    $region40: #{graph_embedding_forward.1} parent=5 // pred_fallthru
      _
    %p455 = scmp.le.s32.totalorder 2, %s11
    // Predicated region
    $region45: #{graph_embedding_forward.1} parent=5 // pred_check
      %p456 = pneg %p455
    $region46: #{graph_embedding_forward.1} parent=5 // pred_check_branch
      %458 = sbr.rel (%p456) target = $region48
    $region47: #{graph_embedding_forward.1} parent=5 // pred_region
      %s459 = ssub.s32 %s11, 2
      // Predicated region
      $region49: #{graph_embedding_forward.1} parent=47 // pred_check
        %p460 = pneg %p150
      $region50: #{graph_embedding_forward.1} parent=47 // pred_check_branch
        %462 = sbr.rel (%p460) target = $region52
      $region51: #{graph_embedding_forward.1} parent=47 // pred_region
        %p463 = scmp.lt.s32.totalorder %s17, 1
        %s464 = scalar_select %p463, %s17, 1
        %s465 = smul.addr %s464, 8
        %s466 = scalar_lea.vmem %s5, %s465
      $region52: #{graph_embedding_forward.1} parent=47 // pred_fallthru
        _
    $region48: #{graph_embedding_forward.1} parent=5 // pred_fallthru
      _
  $region6: #{graph_embedding_forward.1} parent=0 // loop_footer
    %s15 = sadd.s32 1, %s11
  $region7: #{graph_embedding_forward.1} parent=0 // loop_footer_branch
    %10 = sbr.rel target = $region3
  $region8: #{graph_embedding_forward.1} parent=0 // loop_exit
    _

</llo_original>
